<compile_context>
chip_gen: v7x
topology: tpu7x:2x2x1
jax: 0.10.0
libtpu: 0.0.40
codegen_flags: <defaults>
</compile_context>

<pallas_src>
import functools

import jax
import jax.numpy as jnp
from jax.experimental import pallas as pl
from jax.experimental.pallas import tpu as pltpu


# ---------------------------------------------------------------------------
# sizing helpers
# ---------------------------------------------------------------------------
def _vmem_capacity_bytes():
    try:
        return int(pltpu.get_tpu_info().vmem_capacity_bytes)
    except Exception:
        return 64 * 1024 * 1024  # conservative (v7x-sized) default


def _largest_divisor_leq(n, cap):
    cap = max(1, min(n, cap))
    for d in range(cap, 0, -1):
        if n % d == 0:
            return d
    return 1


def _pick_c_block(C, bytes_per_channel, budget_bytes):
    """Channel block must equal C or be a multiple of 8 (sublane layout).
    Prefer a proper split (n_cb >= 2) so the parallel channel axis can feed
    both v7x TensorCores; otherwise fall back to the full channel extent."""
    max_cb = max(1, min(C, 256, budget_bytes // max(1, bytes_per_channel)))
    d = (min(max_cb, C - 1) // 8) * 8
    while d >= 8:
        if C % d == 0:
            return d
        d -= 8
    return C


# ---------------------------------------------------------------------------
# shared tile helper: 3x3 depthwise conv on a (cb, HWp) lane-flattened plane
# ---------------------------------------------------------------------------
def _split_masks(masks):
    """masks: (8, HWp) f32 {0,1} -> 5 boolean (1, HWp) rows
    [left, right, up, down, valid]."""
    return (masks[0:1, :] > 0.5, masks[1:2, :] > 0.5, masks[2:3, :] > 0.5,
            masks[3:4, :] > 0.5, masks[4:5, :] > 0.5)


def _dwconv_tile(x, t, m, *, W, HWp, pad):
    """x: (cb, HWp) input plane; t: (cb, 9) taps (compute dtype, row-major
    (kh, kw)); m: 5-tuple of (1, HWp) bool masks. -> (cb, HWp) f32."""
    m_l, m_r, m_u, m_d, m_v = m
    xc = x.astype(t.dtype)
    zero = jnp.zeros((), t.dtype)

    # Column neighbours: +-1 lane rotations; wrapped lanes removed via select.
    x_l = jnp.where(m_l, pltpu.roll(xc, 1, axis=1), zero)         # x[:, j-1]
    x_r = jnp.where(m_r, pltpu.roll(xc, HWp - 1, axis=1), zero)   # x[:, j+1]

    # Per-kernel-row combinations; per-channel taps broadcast along lanes.
    r0 = t[:, 0:1] * x_l + t[:, 1:2] * xc + t[:, 2:3] * x_r
    r2 = t[:, 6:7] * x_l + t[:, 7:8] * xc + t[:, 8:9] * x_r
    acc = t[:, 3:4] * x_l + t[:, 4:5] * xc + t[:, 5:6] * x_r      # middle row
    # Row neighbours: +-W lane rotations; accumulate to keep live tiles low.
    acc = acc + jnp.where(m_u, pltpu.roll(r0, W % HWp, axis=1), zero)
    acc = acc + jnp.where(m_d, pltpu.roll(r2, (HWp - W) % HWp, axis=1), zero)

    acc = acc.astype(jnp.float32)
    if pad:  # zero padded tail lanes so they never reach the BN statistics
        acc = jnp.where(m_v, acc, 0.0)
    return acc


# ---------------------------------------------------------------------------
# fast path: conv + batch stats + BN affine + ReLU6 in one kernel
# ---------------------------------------------------------------------------
def _fused_kernel(x_ref, w_ref, m_ref, g_ref, b_ref, o_ref, *,
                  N, W, HWp, count, eps, pad, cdt):
    cb = w_ref.shape[0]
    taps = w_ref[...].astype(cdt)
    m = _split_masks(m_ref[...])

    s = jnp.zeros((cb, 1), jnp.float32)
    sq = jnp.zeros((cb, 1), jnp.float32)
    convs = []
    for b in range(N):
        conv = _dwconv_tile(x_ref[b], taps, m, W=W, HWp=HWp, pad=pad)
        convs.append(conv)
        s = s + jnp.sum(conv, axis=1, keepdims=True)
        sq = sq + jnp.sum(conv * conv, axis=1, keepdims=True)

    inv_n = 1.0 / count
    mean = s * inv_n
    var = jnp.maximum(sq * inv_n - mean * mean, 0.0)   # biased (BN training)
    scale = g_ref[...] * jax.lax.rsqrt(var + eps)      # (cb, 1)
    shift = b_ref[...] - mean * scale                  # (cb, 1)
    for b in range(N):
        o_ref[b] = jnp.clip(convs[b] * scale + shift, 0.0, 6.0)


# ---------------------------------------------------------------------------
# general path, pass 1: conv + per-channel sum / sum-of-squares
# ---------------------------------------------------------------------------
def _conv_stats_kernel(x_ref, w_ref, m_ref, stat_ref, *, Nb, W, HWp, pad, cdt):
    @pl.when(pl.program_id(1) == 0)      # batch axis: innermost, "arbitrary"
    def _():                             # -> stat block resident; init once
        stat_ref[...] = jnp.zeros_like(stat_ref)

    cb = w_ref.shape[0]
    taps = w_ref[...].astype(cdt)
    m = _split_masks(m_ref[...])

    s = jnp.zeros((cb, 1), jnp.float32)
    sq = jnp.zeros((cb, 1), jnp.float32)
    for b in range(Nb):
        conv = _dwconv_tile(x_ref[b], taps, m, W=W, HWp=HWp, pad=pad)
        s = s + jnp.sum(conv, axis=1, keepdims=True)
        sq = sq + jnp.sum(conv * conv, axis=1, keepdims=True)
    stat_ref[:, 0:1] += s
    stat_ref[:, 1:2] += sq


# ---------------------------------------------------------------------------
# general path, pass 2: conv (BN scale folded into taps) + shift + ReLU6
# ---------------------------------------------------------------------------
def _conv_bn_relu_kernel(x_ref, w_ref, m_ref, shift_ref, o_ref, *,
                         Nb, W, HWp, pad, cdt):
    taps = w_ref[...].astype(cdt)        # BN scale pre-folded by the wrapper
    m = _split_masks(m_ref[...])
    shift = shift_ref[...]
    for b in range(Nb):
        conv = _dwconv_tile(x_ref[b], taps, m, W=W, HWp=HWp, pad=pad)
        o_ref[b] = jnp.clip(conv + shift, 0.0, 6.0)


# ---------------------------------------------------------------------------
# wrapper
# ---------------------------------------------------------------------------
def spatialwise_conv(x_nchw, w_dw, gamma, beta, eps=1e-5, *,
                     compute_dtype=jnp.float32, force_two_pass=False):
    """x_nchw: (N, C, H, W); w_dw: (C, 1, 3, 3); gamma/beta: (C,). -> NCHW."""
    N, C, H, W = x_nchw.shape
    HW = H * W
    HWp = max(128, ((HW + 127) // 128) * 128)        # lane-dense spatial axis
    pad = HWp != HW

    # Generation-aware VMEM sizing (v7x: 64 MiB physical, v5e/v6e: 128 MiB).
    big_vmem = _vmem_capacity_bytes() >= 100 * 1024 * 1024
    block_budget = (4 if big_vmem else 2) * 1024 * 1024   # per x/out block
    vmem_limit = (64 if big_vmem else 32) * 1024 * 1024

    xf = x_nchw.reshape(N, C, HW).astype(jnp.float32)
    if pad:
        xf = jnp.pad(xf, ((0, 0), (0, 0), (0, HWp - HW)))
    w9 = w_dw.reshape(C, 9).astype(jnp.float32)            # (C, 9) taps

    # 0/1 validity rows for the rolled neighbours + non-padded-lane mask.
    pos = jnp.arange(HWp, dtype=jnp.int32)
    col = pos % W
    mask_rows = jnp.stack(
        [(col != 0),             # left  neighbour (j-1) exists
         (col != W - 1),         # right neighbour (j+1) exists
         (pos >= W),             # row above (i-1) exists
         (pos < HW - W),         # row below (i+1) exists
         (pos < HW)],            # lane is a real (non-padded) pixel
        axis=0).astype(jnp.float32)
    masks = jnp.concatenate(
        [mask_rows, jnp.zeros((3, HWp), jnp.float32)], axis=0)   # (8, HWp)

    gamma_c1 = gamma.reshape(C, 1).astype(jnp.float32)
    beta_c1 = beta.reshape(C, 1).astype(jnp.float32)
    count = float(N * HW)

    # ---- fast path: whole batch per channel block fits VMEM --------------
    cb_f = _pick_c_block(C, N * HWp * 4, block_budget)
    fused_ok = (not force_two_pass and N <= 16
                and N * cb_f * HWp * 4 <= block_budget)

    if fused_ok:
        n_cb = C // cb_f
        out_f = pl.pallas_call(
            functools.partial(_fused_kernel, N=N, W=W, HWp=HWp, count=count,
                              eps=eps, pad=pad, cdt=compute_dtype),
            grid=(n_cb,),
            in_specs=[
                pl.BlockSpec((N, cb_f, HWp), lambda c: (0, c, 0)),
                pl.BlockSpec((cb_f, 9), lambda c: (c, 0)),
                pl.BlockSpec((8, HWp), lambda c: (0, 0)),
                pl.BlockSpec((cb_f, 1), lambda c: (c, 0)),
                pl.BlockSpec((cb_f, 1), lambda c: (c, 0)),
            ],
            out_specs=pl.BlockSpec((N, cb_f, HWp), lambda c: (0, c, 0)),
            out_shape=jax.ShapeDtypeStruct((N, C, HWp), jnp.float32),
            compiler_params=pltpu.CompilerParams(
                dimension_semantics=("parallel",),
                vmem_limit_bytes=vmem_limit),
            cost_estimate=pl.CostEstimate(
                flops=30 * N * C * HW, transcendentals=C,
                bytes_accessed=4 * (2 * N * C * HWp + 11 * C + 8 * HWp)),
        )(xf, w9, masks, gamma_c1, beta_c1)
    else:
        # ---- general path: two passes over HBM ---------------------------
        cb = _pick_c_block(C, HWp * 4, block_budget)
        n_cb = C // cb
        Nb = _largest_divisor_leq(
            N, min(8, max(1, block_budget // (cb * HWp * 4))))
        n_nb = N // Nb

        # pass 1: conv + per-channel batch statistics (sum, sumsq)
        stats = pl.pallas_call(
            functools.partial(_conv_stats_kernel, Nb=Nb, W=W, HWp=HWp,
                              pad=pad, cdt=compute_dtype),
            grid=(n_cb, n_nb),   # batch axis LAST and "arbitrary": the stat
            in_specs=[           # block stays resident; do not reorder.
                pl.BlockSpec((Nb, cb, HWp), lambda c, n: (n, c, 0)),
                pl.BlockSpec((cb, 9), lambda c, n: (c, 0)),
                pl.BlockSpec((8, HWp), lambda c, n: (0, 0)),
            ],
            out_specs=pl.BlockSpec((cb, 2), lambda c, n: (c, 0)),
            out_shape=jax.ShapeDtypeStruct((C, 2), jnp.float32),
            compiler_params=pltpu.CompilerParams(
                dimension_semantics=("parallel", "arbitrary"),
                vmem_limit_bytes=vmem_limit),
            cost_estimate=pl.CostEstimate(
                flops=29 * N * C * HW, transcendentals=0,
                bytes_accessed=4 * (N * C * HWp + 9 * C + 8 * HWp + 2 * C)),
        )(xf, w9, masks)

        # Exact batch statistics (biased variance, as nn.BatchNorm2d training).
        mean = stats[:, 0:1] / count
        var = jnp.maximum(stats[:, 1:2] / count - mean * mean, 0.0)
        scale = gamma_c1 * jax.lax.rsqrt(var + eps)          # (C, 1)
        shift = beta_c1 - mean * scale                       # (C, 1)
        w9_scaled = w9 * scale    # conv is linear in taps: fold BN scale here

        # pass 2: conv (recomputed with scaled taps) + shift + ReLU6
        out_f = pl.pallas_call(
            functools.partial(_conv_bn_relu_kernel, Nb=Nb, W=W, HWp=HWp,
                              pad=pad, cdt=compute_dtype),
            grid=(n_cb, n_nb),
            in_specs=[
                pl.BlockSpec((Nb, cb, HWp), lambda c, n: (n, c, 0)),
                pl.BlockSpec((cb, 9), lambda c, n: (c, 0)),
                pl.BlockSpec((8, HWp), lambda c, n: (0, 0)),
                pl.BlockSpec((cb, 1), lambda c, n: (c, 0)),
            ],
            out_specs=pl.BlockSpec((Nb, cb, HWp), lambda c, n: (n, c, 0)),
            out_shape=jax.ShapeDtypeStruct((N, C, HWp), jnp.float32),
            compiler_params=pltpu.CompilerParams(
                dimension_semantics=("parallel", "parallel"),
                vmem_limit_bytes=vmem_limit),
            cost_estimate=pl.CostEstimate(
                flops=28 * N * C * HW, transcendentals=0,
                bytes_accessed=4 * (2 * N * C * HWp + 9 * C + 8 * HWp + C)),
        )(xf, w9_scaled, masks, shift)

    out = out_f[:, :, :HW] if pad else out_f
    return out.reshape(N, C, H, W).astype(x_nchw.dtype)


def reference(x_nchw, w_dw, gamma, beta, eps=1e-5):
    """Plain-JAX reference (for correctness check only)."""
    C = x_nchw.shape[1]
    conv = jax.lax.conv_general_dilated(
        x_nchw, w_dw, window_strides=(1, 1), padding=((1, 1), (1, 1)),
        dimension_numbers=("NCHW", "OIHW", "NCHW"), feature_group_count=C)
    mean = jnp.mean(conv, axis=(0, 2, 3), keepdims=True)
    var = jnp.var(conv, axis=(0, 2, 3), keepdims=True)        # biased
    y = (conv - mean) * jax.lax.rsqrt(var + eps)
    y = y * gamma.reshape(1, -1, 1, 1) + beta.reshape(1, -1, 1, 1)
    return jnp.clip(y, 0.0, 6.0)


if __name__ == "__main__":
    # Small deterministic problem: N=2, channel_proxy=4, spatial 16x16.
    key = jax.random.PRNGKey(0)
    kx, kw, kg, kb = jax.random.split(key, 4)

    N, C, H, W = 2, 4, 16, 16
    x = jax.random.normal(kx, (N, C, H, W), dtype=jnp.float32)
    # Depthwise conv weight, PyTorch shape (C, 1, 3, 3); deterministic init.
    w_dw = 0.2 * jax.random.normal(kw, (C, 1, 3, 3), dtype=jnp.float32)
    # Non-trivial BN affine parameters (deterministic).
    gamma = 1.0 + 0.1 * jax.random.normal(kg, (C,), dtype=jnp.float32)
    beta = 0.1 * jax.random.normal(kb, (C,), dtype=jnp.float32)

    ref = jax.block_until_ready(reference(x, w_dw, gamma, beta))

    # Fast path (single fused kernel).
    out = jax.block_until_ready(jax.jit(spatialwise_conv)(x, w_dw, gamma, beta))
    assert out.shape == (N, C, H, W)
    assert jnp.allclose(out, ref, rtol=1e-4, atol=1e-4), "fused path mismatch"

    # General two-pass path (exercised explicitly so both pipelines are tested).
    fwd2 = jax.jit(functools.partial(spatialwise_conv, force_two_pass=True))
    out2 = jax.block_until_ready(fwd2(x, w_dw, gamma, beta))
    assert jnp.allclose(out2, ref, rtol=1e-4, atol=1e-4), "two-pass mismatch"

    print("KERNEL_OK")
</pallas_src>

<mosaic_0001>
module attributes {stable_mosaic.version = 11 : i64} {
  func.func @_fused_kernel(%arg0: i32, %arg1: memref<2x4x256xf32, #tpu.memory_space<vmem>>, %arg2: memref<4x9xf32, #tpu.memory_space<vmem>>, %arg3: memref<8x256xf32, #tpu.memory_space<vmem>>, %arg4: memref<4x1xf32, #tpu.memory_space<vmem>>, %arg5: memref<4x1xf32, #tpu.memory_space<vmem>>, %arg6: memref<2x4x256xf32, #tpu.memory_space<vmem>>) attributes {dimension_semantics = [#tpu.dimension_semantics<parallel>], iteration_bounds = array<i64: 1>, scalar_prefetch = 0 : i64, scratch_operands = 0 : i64, tpu.core_type = #tpu.core_type<tc>, window_params = [{transform_indices = @transform_0, window_bounds = array<i64: 2, 4, 256>}, {transform_indices = @transform_1, window_bounds = array<i64: 4, 9>}, {pipeline_mode = #tpu.pipeline_mode<synchronous>, transform_indices = @transform_2, window_bounds = array<i64: 8, 256>}, {transform_indices = @transform_3, window_bounds = array<i64: 4, 1>}, {transform_indices = @transform_4, window_bounds = array<i64: 4, 1>}, {transform_indices = @transform_5, window_bounds = array<i64: 2, 4, 256>}]} {
    %c0 = arith.constant 0 : index
    %c0_0 = arith.constant 0 : index
    %0 = vector.load %arg2[%c0, %c0_0] : memref<4x9xf32, #tpu.memory_space<vmem>>, vector<4x9xf32>
    %c0_1 = arith.constant 0 : index
    %c0_2 = arith.constant 0 : index
    %1 = vector.load %arg3[%c0_1, %c0_2] : memref<8x256xf32, #tpu.memory_space<vmem>>, vector<8x256xf32>
    %2 = vector.extract_strided_slice %1 {offsets = [0, 0], sizes = [1, 256], strides = [1, 1]} : vector<8x256xf32> to vector<1x256xf32>
    %cst = arith.constant 5.000000e-01 : f32
    %3 = vector.broadcast %cst : f32 to vector<1x256xf32>
    %4 = arith.cmpf ogt, %2, %3 : vector<1x256xf32>
    %5 = vector.extract_strided_slice %1 {offsets = [1, 0], sizes = [1, 256], strides = [1, 1]} : vector<8x256xf32> to vector<1x256xf32>
    %cst_3 = arith.constant 5.000000e-01 : f32
    %6 = vector.broadcast %cst_3 : f32 to vector<1x256xf32>
    %7 = arith.cmpf ogt, %5, %6 : vector<1x256xf32>
    %8 = vector.extract_strided_slice %1 {offsets = [2, 0], sizes = [1, 256], strides = [1, 1]} : vector<8x256xf32> to vector<1x256xf32>
    %cst_4 = arith.constant 5.000000e-01 : f32
    %9 = vector.broadcast %cst_4 : f32 to vector<1x256xf32>
    %10 = arith.cmpf ogt, %8, %9 : vector<1x256xf32>
    %11 = vector.extract_strided_slice %1 {offsets = [3, 0], sizes = [1, 256], strides = [1, 1]} : vector<8x256xf32> to vector<1x256xf32>
    %cst_5 = arith.constant 5.000000e-01 : f32
    %12 = vector.broadcast %cst_5 : f32 to vector<1x256xf32>
    %13 = arith.cmpf ogt, %11, %12 : vector<1x256xf32>
    %cst_6 = arith.constant 0.000000e+00 : f32
    %14 = vector.broadcast %cst_6 : f32 to vector<4x1xf32>
    %cst_7 = arith.constant 0.000000e+00 : f32
    %15 = vector.broadcast %cst_7 : f32 to vector<4x1xf32>
    %c0_8 = arith.constant 0 : index
    %c0_9 = arith.constant 0 : index
    %c0_10 = arith.constant 0 : index
    %16 = vector.load %arg1[%c0_8, %c0_9, %c0_10] : memref<2x4x256xf32, #tpu.memory_space<vmem>>, vector<1x4x256xf32>
    %17 = vector.shape_cast %16 : vector<1x4x256xf32> to vector<4x256xf32>
    %c1_i32 = arith.constant 1 : i32
    %18 = tpu.dynamic_rotate %17 by %c1_i32 dim 1 : vector<4x256xf32>, i32 -> vector<4x256xf32>
    %cst_11 = arith.constant 0.000000e+00 : f32
    %19 = vector.shape_cast %4 : vector<1x256xi1> to vector<1x256xi1>
    %20 = vector.broadcast %19 : vector<1x256xi1> to vector<4x256xi1>
    %21 = vector.broadcast %cst_11 : f32 to vector<4x256xf32>
    %22 = arith.select %20, %18, %21 : vector<4x256xi1>, vector<4x256xf32>
    %c255_i32 = arith.constant 255 : i32
    %23 = tpu.dynamic_rotate %17 by %c255_i32 dim 1 : vector<4x256xf32>, i32 -> vector<4x256xf32>
    %cst_12 = arith.constant 0.000000e+00 : f32
    %24 = vector.shape_cast %7 : vector<1x256xi1> to vector<1x256xi1>
    %25 = vector.broadcast %24 : vector<1x256xi1> to vector<4x256xi1>
    %26 = vector.broadcast %cst_12 : f32 to vector<4x256xf32>
    %27 = arith.select %25, %23, %26 : vector<4x256xi1>, vector<4x256xf32>
    %28 = vector.extract_strided_slice %0 {offsets = [0, 0], sizes = [4, 1], strides = [1, 1]} : vector<4x9xf32> to vector<4x1xf32>
    %29 = vector.broadcast %28 : vector<4x1xf32> to vector<4x256xf32>
    %30 = arith.mulf %29, %22 : vector<4x256xf32>
    %31 = vector.extract_strided_slice %0 {offsets = [0, 1], sizes = [4, 1], strides = [1, 1]} : vector<4x9xf32> to vector<4x1xf32>
    %32 = vector.broadcast %31 : vector<4x1xf32> to vector<4x256xf32>
    %33 = arith.mulf %32, %17 : vector<4x256xf32>
    %34 = arith.addf %30, %33 : vector<4x256xf32>
    %35 = vector.extract_strided_slice %0 {offsets = [0, 2], sizes = [4, 1], strides = [1, 1]} : vector<4x9xf32> to vector<4x1xf32>
    %36 = vector.broadcast %35 : vector<4x1xf32> to vector<4x256xf32>
    %37 = arith.mulf %36, %27 : vector<4x256xf32>
    %38 = arith.addf %34, %37 : vector<4x256xf32>
    %39 = vector.extract_strided_slice %0 {offsets = [0, 6], sizes = [4, 1], strides = [1, 1]} : vector<4x9xf32> to vector<4x1xf32>
    %40 = vector.broadcast %39 : vector<4x1xf32> to vector<4x256xf32>
    %41 = arith.mulf %40, %22 : vector<4x256xf32>
    %42 = vector.extract_strided_slice %0 {offsets = [0, 7], sizes = [4, 1], strides = [1, 1]} : vector<4x9xf32> to vector<4x1xf32>
    %43 = vector.broadcast %42 : vector<4x1xf32> to vector<4x256xf32>
    %44 = arith.mulf %43, %17 : vector<4x256xf32>
    %45 = arith.addf %41, %44 : vector<4x256xf32>
    %46 = vector.extract_strided_slice %0 {offsets = [0, 8], sizes = [4, 1], strides = [1, 1]} : vector<4x9xf32> to vector<4x1xf32>
    %47 = vector.broadcast %46 : vector<4x1xf32> to vector<4x256xf32>
    %48 = arith.mulf %47, %27 : vector<4x256xf32>
    %49 = arith.addf %45, %48 : vector<4x256xf32>
    %50 = vector.extract_strided_slice %0 {offsets = [0, 3], sizes = [4, 1], strides = [1, 1]} : vector<4x9xf32> to vector<4x1xf32>
    %51 = vector.broadcast %50 : vector<4x1xf32> to vector<4x256xf32>
    %52 = arith.mulf %51, %22 : vector<4x256xf32>
    %53 = vector.extract_strided_slice %0 {offsets = [0, 4], sizes = [4, 1], strides = [1, 1]} : vector<4x9xf32> to vector<4x1xf32>
    %54 = vector.broadcast %53 : vector<4x1xf32> to vector<4x256xf32>
    %55 = arith.mulf %54, %17 : vector<4x256xf32>
    %56 = arith.addf %52, %55 : vector<4x256xf32>
    %57 = vector.extract_strided_slice %0 {offsets = [0, 5], sizes = [4, 1], strides = [1, 1]} : vector<4x9xf32> to vector<4x1xf32>
    %58 = vector.broadcast %57 : vector<4x1xf32> to vector<4x256xf32>
    %59 = arith.mulf %58, %27 : vector<4x256xf32>
    %60 = arith.addf %56, %59 : vector<4x256xf32>
    %c16_i32 = arith.constant 16 : i32
    %61 = tpu.dynamic_rotate %38 by %c16_i32 dim 1 : vector<4x256xf32>, i32 -> vector<4x256xf32>
    %cst_13 = arith.constant 0.000000e+00 : f32
    %62 = vector.shape_cast %10 : vector<1x256xi1> to vector<1x256xi1>
    %63 = vector.broadcast %62 : vector<1x256xi1> to vector<4x256xi1>
    %64 = vector.broadcast %cst_13 : f32 to vector<4x256xf32>
    %65 = arith.select %63, %61, %64 : vector<4x256xi1>, vector<4x256xf32>
    %66 = arith.addf %60, %65 : vector<4x256xf32>
    %c240_i32 = arith.constant 240 : i32
    %67 = tpu.dynamic_rotate %49 by %c240_i32 dim 1 : vector<4x256xf32>, i32 -> vector<4x256xf32>
    %cst_14 = arith.constant 0.000000e+00 : f32
    %68 = vector.shape_cast %13 : vector<1x256xi1> to vector<1x256xi1>
    %69 = vector.broadcast %68 : vector<1x256xi1> to vector<4x256xi1>
    %70 = vector.broadcast %cst_14 : f32 to vector<4x256xf32>
    %71 = arith.select %69, %67, %70 : vector<4x256xi1>, vector<4x256xf32>
    %72 = arith.addf %66, %71 : vector<4x256xf32>
    %cst_15 = arith.constant dense<0.000000e+00> : vector<4xf32>
    %73 = vector.multi_reduction <add>, %72, %cst_15 [1] : vector<4x256xf32> to vector<4xf32>
    %74 = vector.shape_cast %73 : vector<4xf32> to vector<4x1xf32>
    %75 = arith.addf %14, %74 : vector<4x1xf32>
    %76 = arith.mulf %72, %72 : vector<4x256xf32>
    %cst_16 = arith.constant dense<0.000000e+00> : vector<4xf32>
    %77 = vector.multi_reduction <add>, %76, %cst_16 [1] : vector<4x256xf32> to vector<4xf32>
    %78 = vector.shape_cast %77 : vector<4xf32> to vector<4x1xf32>
    %79 = arith.addf %15, %78 : vector<4x1xf32>
    %c1 = arith.constant 1 : index
    %c0_17 = arith.constant 0 : index
    %c0_18 = arith.constant 0 : index
    %80 = vector.load %arg1[%c1, %c0_17, %c0_18] : memref<2x4x256xf32, #tpu.memory_space<vmem>>, vector<1x4x256xf32>
    %81 = vector.shape_cast %80 : vector<1x4x256xf32> to vector<4x256xf32>
    %c1_i32_19 = arith.constant 1 : i32
    %82 = tpu.dynamic_rotate %81 by %c1_i32_19 dim 1 : vector<4x256xf32>, i32 -> vector<4x256xf32>
    %cst_20 = arith.constant 0.000000e+00 : f32
    %83 = vector.shape_cast %4 : vector<1x256xi1> to vector<1x256xi1>
    %84 = vector.broadcast %83 : vector<1x256xi1> to vector<4x256xi1>
    %85 = vector.broadcast %cst_20 : f32 to vector<4x256xf32>
    %86 = arith.select %84, %82, %85 : vector<4x256xi1>, vector<4x256xf32>
    %c255_i32_21 = arith.constant 255 : i32
    %87 = tpu.dynamic_rotate %81 by %c255_i32_21 dim 1 : vector<4x256xf32>, i32 -> vector<4x256xf32>
    %cst_22 = arith.constant 0.000000e+00 : f32
    %88 = vector.shape_cast %7 : vector<1x256xi1> to vector<1x256xi1>
    %89 = vector.broadcast %88 : vector<1x256xi1> to vector<4x256xi1>
    %90 = vector.broadcast %cst_22 : f32 to vector<4x256xf32>
    %91 = arith.select %89, %87, %90 : vector<4x256xi1>, vector<4x256xf32>
    %92 = vector.extract_strided_slice %0 {offsets = [0, 0], sizes = [4, 1], strides = [1, 1]} : vector<4x9xf32> to vector<4x1xf32>
    %93 = vector.broadcast %92 : vector<4x1xf32> to vector<4x256xf32>
    %94 = arith.mulf %93, %86 : vector<4x256xf32>
    %95 = vector.extract_strided_slice %0 {offsets = [0, 1], sizes = [4, 1], strides = [1, 1]} : vector<4x9xf32> to vector<4x1xf32>
    %96 = vector.broadcast %95 : vector<4x1xf32> to vector<4x256xf32>
    %97 = arith.mulf %96, %81 : vector<4x256xf32>
    %98 = arith.addf %94, %97 : vector<4x256xf32>
    %99 = vector.extract_strided_slice %0 {offsets = [0, 2], sizes = [4, 1], strides = [1, 1]} : vector<4x9xf32> to vector<4x1xf32>
    %100 = vector.broadcast %99 : vector<4x1xf32> to vector<4x256xf32>
    %101 = arith.mulf %100, %91 : vector<4x256xf32>
    %102 = arith.addf %98, %101 : vector<4x256xf32>
    %103 = vector.extract_strided_slice %0 {offsets = [0, 6], sizes = [4, 1], strides = [1, 1]} : vector<4x9xf32> to vector<4x1xf32>
    %104 = vector.broadcast %103 : vector<4x1xf32> to vector<4x256xf32>
    %105 = arith.mulf %104, %86 : vector<4x256xf32>
    %106 = vector.extract_strided_slice %0 {offsets = [0, 7], sizes = [4, 1], strides = [1, 1]} : vector<4x9xf32> to vector<4x1xf32>
    %107 = vector.broadcast %106 : vector<4x1xf32> to vector<4x256xf32>
    %108 = arith.mulf %107, %81 : vector<4x256xf32>
    %109 = arith.addf %105, %108 : vector<4x256xf32>
    %110 = vector.extract_strided_slice %0 {offsets = [0, 8], sizes = [4, 1], strides = [1, 1]} : vector<4x9xf32> to vector<4x1xf32>
    %111 = vector.broadcast %110 : vector<4x1xf32> to vector<4x256xf32>
    %112 = arith.mulf %111, %91 : vector<4x256xf32>
    %113 = arith.addf %109, %112 : vector<4x256xf32>
    %114 = vector.extract_strided_slice %0 {offsets = [0, 3], sizes = [4, 1], strides = [1, 1]} : vector<4x9xf32> to vector<4x1xf32>
    %115 = vector.broadcast %114 : vector<4x1xf32> to vector<4x256xf32>
    %116 = arith.mulf %115, %86 : vector<4x256xf32>
    %117 = vector.extract_strided_slice %0 {offsets = [0, 4], sizes = [4, 1], strides = [1, 1]} : vector<4x9xf32> to vector<4x1xf32>
    %118 = vector.broadcast %117 : vector<4x1xf32> to vector<4x256xf32>
    %119 = arith.mulf %118, %81 : vector<4x256xf32>
    %120 = arith.addf %116, %119 : vector<4x256xf32>
    %121 = vector.extract_strided_slice %0 {offsets = [0, 5], sizes = [4, 1], strides = [1, 1]} : vector<4x9xf32> to vector<4x1xf32>
    %122 = vector.broadcast %121 : vector<4x1xf32> to vector<4x256xf32>
    %123 = arith.mulf %122, %91 : vector<4x256xf32>
    %124 = arith.addf %120, %123 : vector<4x256xf32>
    %c16_i32_23 = arith.constant 16 : i32
    %125 = tpu.dynamic_rotate %102 by %c16_i32_23 dim 1 : vector<4x256xf32>, i32 -> vector<4x256xf32>
    %cst_24 = arith.constant 0.000000e+00 : f32
    %126 = vector.shape_cast %10 : vector<1x256xi1> to vector<1x256xi1>
    %127 = vector.broadcast %126 : vector<1x256xi1> to vector<4x256xi1>
    %128 = vector.broadcast %cst_24 : f32 to vector<4x256xf32>
    %129 = arith.select %127, %125, %128 : vector<4x256xi1>, vector<4x256xf32>
    %130 = arith.addf %124, %129 : vector<4x256xf32>
    %c240_i32_25 = arith.constant 240 : i32
    %131 = tpu.dynamic_rotate %113 by %c240_i32_25 dim 1 : vector<4x256xf32>, i32 -> vector<4x256xf32>
    %cst_26 = arith.constant 0.000000e+00 : f32
    %132 = vector.shape_cast %13 : vector<1x256xi1> to vector<1x256xi1>
    %133 = vector.broadcast %132 : vector<1x256xi1> to vector<4x256xi1>
    %134 = vector.broadcast %cst_26 : f32 to vector<4x256xf32>
    %135 = arith.select %133, %131, %134 : vector<4x256xi1>, vector<4x256xf32>
    %136 = arith.addf %130, %135 : vector<4x256xf32>
    %cst_27 = arith.constant dense<0.000000e+00> : vector<4xf32>
    %137 = vector.multi_reduction <add>, %136, %cst_27 [1] : vector<4x256xf32> to vector<4xf32>
    %138 = vector.shape_cast %137 : vector<4xf32> to vector<4x1xf32>
    %139 = arith.addf %75, %138 : vector<4x1xf32>
    %140 = arith.mulf %136, %136 : vector<4x256xf32>
    %cst_28 = arith.constant dense<0.000000e+00> : vector<4xf32>
    %141 = vector.multi_reduction <add>, %140, %cst_28 [1] : vector<4x256xf32> to vector<4xf32>
    %142 = vector.shape_cast %141 : vector<4xf32> to vector<4x1xf32>
    %143 = arith.addf %79, %142 : vector<4x1xf32>
    %cst_29 = arith.constant 0.001953125 : f32
    %144 = vector.broadcast %cst_29 : f32 to vector<4x1xf32>
    %145 = arith.mulf %139, %144 : vector<4x1xf32>
    %cst_30 = arith.constant 0.001953125 : f32
    %146 = vector.broadcast %cst_30 : f32 to vector<4x1xf32>
    %147 = arith.mulf %143, %146 : vector<4x1xf32>
    %148 = arith.mulf %145, %145 : vector<4x1xf32>
    %149 = arith.subf %147, %148 : vector<4x1xf32>
    %cst_31 = arith.constant 0.000000e+00 : f32
    %150 = vector.broadcast %cst_31 : f32 to vector<4x1xf32>
    %151 = arith.maximumf %149, %150 : vector<4x1xf32>
    %c0_32 = arith.constant 0 : index
    %c0_33 = arith.constant 0 : index
    %152 = vector.load %arg4[%c0_32, %c0_33] : memref<4x1xf32, #tpu.memory_space<vmem>>, vector<4x1xf32>
    %cst_34 = arith.constant 9.99999974E-6 : f32
    %153 = vector.broadcast %cst_34 : f32 to vector<4x1xf32>
    %154 = arith.addf %151, %153 : vector<4x1xf32>
    %155 = math.rsqrt %154 : vector<4x1xf32>
    %156 = arith.mulf %152, %155 : vector<4x1xf32>
    %c0_35 = arith.constant 0 : index
    %c0_36 = arith.constant 0 : index
    %157 = vector.load %arg5[%c0_35, %c0_36] : memref<4x1xf32, #tpu.memory_space<vmem>>, vector<4x1xf32>
    %158 = arith.mulf %145, %156 : vector<4x1xf32>
    %159 = arith.subf %157, %158 : vector<4x1xf32>
    %160 = vector.broadcast %156 : vector<4x1xf32> to vector<4x256xf32>
    %161 = arith.mulf %72, %160 : vector<4x256xf32>
    %162 = vector.broadcast %159 : vector<4x1xf32> to vector<4x256xf32>
    %163 = arith.addf %161, %162 : vector<4x256xf32>
    %cst_37 = arith.constant 0.000000e+00 : f32
    %cst_38 = arith.constant 6.000000e+00 : f32
    %164 = vector.broadcast %cst_37 : f32 to vector<4x256xf32>
    %165 = arith.maximumf %164, %163 : vector<4x256xf32>
    %166 = vector.broadcast %cst_38 : f32 to vector<4x256xf32>
    %167 = arith.minimumf %166, %165 : vector<4x256xf32>
    %c0_39 = arith.constant 0 : index
    %c0_40 = arith.constant 0 : index
    %c0_41 = arith.constant 0 : index
    %168 = vector.load %arg6[%c0_39, %c0_40, %c0_41] : memref<2x4x256xf32, #tpu.memory_space<vmem>>, vector<1x4x256xf32>
    %169 = vector.shape_cast %168 : vector<1x4x256xf32> to vector<4x256xf32>
    %170 = vector.shape_cast %167 : vector<4x256xf32> to vector<1x4x256xf32>
    tpu.vector_store %arg6[%c0_39, %c0_40, %c0_41], %170 {strides = array<i32>} : memref<2x4x256xf32, #tpu.memory_space<vmem>>, vector<1x4x256xf32>,
    %171 = vector.broadcast %156 : vector<4x1xf32> to vector<4x256xf32>
    %172 = arith.mulf %136, %171 : vector<4x256xf32>
    %173 = vector.broadcast %159 : vector<4x1xf32> to vector<4x256xf32>
    %174 = arith.addf %172, %173 : vector<4x256xf32>
    %cst_42 = arith.constant 0.000000e+00 : f32
    %cst_43 = arith.constant 6.000000e+00 : f32
    %175 = vector.broadcast %cst_42 : f32 to vector<4x256xf32>
    %176 = arith.maximumf %175, %174 : vector<4x256xf32>
    %177 = vector.broadcast %cst_43 : f32 to vector<4x256xf32>
    %178 = arith.minimumf %177, %176 : vector<4x256xf32>
    %c1_44 = arith.constant 1 : index
    %c0_45 = arith.constant 0 : index
    %c0_46 = arith.constant 0 : index
    %179 = vector.load %arg6[%c1_44, %c0_45, %c0_46] : memref<2x4x256xf32, #tpu.memory_space<vmem>>, vector<1x4x256xf32>
    %180 = vector.shape_cast %179 : vector<1x4x256xf32> to vector<4x256xf32>
    %181 = vector.shape_cast %178 : vector<4x256xf32> to vector<1x4x256xf32>
    tpu.vector_store %arg6[%c1_44, %c0_45, %c0_46], %181 {strides = array<i32>} : memref<2x4x256xf32, #tpu.memory_space<vmem>>, vector<1x4x256xf32>,
    return
  }
  func.func @transform_0(%arg0: i32) -> (i32, i32, i32) {
    %c0_i32 = arith.constant 0 : i32
    %c0_i32_0 = arith.constant 0 : i32
    %c0_i32_1 = arith.constant 0 : i32
    return %c0_i32, %arg0, %c0_i32_0 : i32, i32, i32
  }
  func.func @transform_1(%arg0: i32) -> (i32, i32) {
    %c0_i32 = arith.constant 0 : i32
    %c0_i32_0 = arith.constant 0 : i32
    return %arg0, %c0_i32 : i32, i32
  }
  func.func @transform_2(%arg0: i32) -> (i32, i32) {
    %c0_i32 = arith.constant 0 : i32
    %c0_i32_0 = arith.constant 0 : i32
    %c0_i32_1 = arith.constant 0 : i32
    return %c0_i32, %c0_i32_0 : i32, i32
  }
  func.func @transform_3(%arg0: i32) -> (i32, i32) {
    %c0_i32 = arith.constant 0 : i32
    %c0_i32_0 = arith.constant 0 : i32
    return %arg0, %c0_i32 : i32, i32
  }
  func.func @transform_4(%arg0: i32) -> (i32, i32) {
    %c0_i32 = arith.constant 0 : i32
    %c0_i32_0 = arith.constant 0 : i32
    return %arg0, %c0_i32 : i32, i32
  }
  func.func @transform_5(%arg0: i32) -> (i32, i32, i32) {
    %c0_i32 = arith.constant 0 : i32
    %c0_i32_0 = arith.constant 0 : i32
    %c0_i32_1 = arith.constant 0 : i32
    return %c0_i32, %arg0, %c0_i32_0 : i32, i32, i32
  }
}

</mosaic_0001>

<llo_original>
// kernel: spatialwise_conv.1
$region0: #{spatialwise_conv.1}
  #allocation0 [shape = 'u32[]', space=smem, size = 0x4, offset = 0x4, fixed_abs, tag = 'smem constant byte address 0x4 - core index']
  #allocation1 [shape = 'u32[144,128]{1,0:T(1,128)}', space=vmem, size = 0x12000, scoped, tag = 'internal scratch']
  %s0 = inlined_call_operand.vmem [shape: f32[2,4,256], index: 0, kind: input, shape index: {}]
  %s1 = inlined_call_operand.vmem [shape: f32[4,9], index: 1, kind: input, shape index: {}]
  %s2 = inlined_call_operand.vmem [shape: f32[8,256], index: 2, kind: input, shape index: {}]
  %s3 = inlined_call_operand.vmem [shape: f32[4,1], index: 3, kind: input, shape index: {}]
  %s4 = inlined_call_operand.vmem [shape: f32[4,1], index: 4, kind: input, shape index: {}]
  %s5 = inlined_call_operand.vmem [shape: f32[2,4,256], index: 5, kind: output, shape index: {}]
  %s6 = sld [smem:[#allocation0]]
  $region30: #{spatialwise_conv.1} parent=0
    _
  %s8 = ssub.s32 1, %s6
  %s9 = scalar_select 0, %s8, %s6
  // Predicated region
  $region2: #{spatialwise_conv.1} parent=0 // pred_check
    _
  $region3: #{spatialwise_conv.1} parent=0 // pred_check_branch
    %11 = sbr.rel (0) target = $region5
  $region4: #{spatialwise_conv.1} parent=0 // pred_region
    _
  $region5: #{spatialwise_conv.1} parent=0 // pred_fallthru
    _
  // Predicated region
  $region6: #{spatialwise_conv.1} parent=0 // pred_check
    _
  $region7: #{spatialwise_conv.1} parent=0 // pred_check_branch
    %13 = sbr.rel (0) target = $region9
  $region8: #{spatialwise_conv.1} parent=0 // pred_region
    _
  $region9: #{spatialwise_conv.1} parent=0 // pred_fallthru
    _
  // Predicated region
  $region10: #{spatialwise_conv.1} parent=0 // pred_check
    _
  $region11: #{spatialwise_conv.1} parent=0 // pred_check_branch
    %15 = sbr.rel (0) target = $region13
  $region12: #{spatialwise_conv.1} parent=0 // pred_region
    _
  $region13: #{spatialwise_conv.1} parent=0 // pred_fallthru
    _
  // Predicated region
  $region14: #{spatialwise_conv.1} parent=0 // pred_check
    _
  $region15: #{spatialwise_conv.1} parent=0 // pred_check_branch
    %17 = sbr.rel (0) target = $region17
  $region16: #{spatialwise_conv.1} parent=0 // pred_region
    _
  $region17: #{spatialwise_conv.1} parent=0 // pred_fallthru
    _
  // Predicated region
  $region18: #{spatialwise_conv.1} parent=0 // pred_check
    _
  $region19: #{spatialwise_conv.1} parent=0 // pred_check_branch
    %19 = sbr.rel (0) target = $region21
  $region20: #{spatialwise_conv.1} parent=0 // pred_region
    _
  $region21: #{spatialwise_conv.1} parent=0 // pred_fallthru
    _
  %v20 = vld [vmem:[%s1] sm:$0xf]
  %v21 = vld [vmem:[%s2] sm:$0xff]
  %v22 = vld [vmem:[%s2 + $0x8] sm:$0xff]
  %vm23 = vcmp.gt.f32.partialorder %v21, 0.5
  %vm24 = vcmp.gt.f32.partialorder %v22, 0.5
  %v25 = vld [vmem:[%s0] sm:$0xff]
  %v27 = vcombine.high %v25, %v25
  %29 = vrot.lane.b32.xlu0 %v25, 1
  %v30 = vpop.permute.xlu0 %29
  %31 = vrot.lane.b32.xlu0 %v27, 1
  %v32 = vpop.permute.xlu0 %31
  %v33 = vlaneseq
  %v34 = vand.u32 %v33, 127
  %vm35 = vcmp.lt.s32.totalorder %v34, 1
  %v36 = vsel %vm35, %v30, %v32
  %v37 = vsel %vm35, %v32, %v30
  %v38 = vsel %vm23, 1, 0
  %v39 = vsel %vm24, 1, 0
  %v40 = vlaneseq
  %v41 = vshrl.u32 %v40, 7
  %v42 = vsub.s32 0, %v41
  %v43 = vrot.slane %v38, %v42
  %v44 = vlaneseq
  %v45 = vshrl.u32 %v44, 7
  %v46 = vsub.s32 0, %v45
  %v47 = vrot.slane %v39, %v46
  %vm48 = vcmp.eq.s32.totalorder %v43, 1
  %vm49 = vcmp.eq.s32.totalorder %v47, 1
  %v50 = vsel %vm48, %v37, 0.0
  %v51 = vsel %vm49, %v36, 0.0
  %52 = vrot.lane.b32.xlu0 %v25, 127
  %v53 = vpop.permute.xlu0 %52
  %54 = vrot.lane.b32.xlu0 %v27, 127
  %v55 = vpop.permute.xlu0 %54
  %vm56 = vcmp.lt.s32.totalorder %v34, 127
  %v57 = vsel %vm56, %v53, %v55
  %v58 = vsel %vm56, %v55, %v53
  %v59 = vlaneseq
  %v60 = vshrl.u32 %v59, 7
  %v61 = vsub.s32 1, %v60
  %v62 = vrot.slane %v38, %v61
  %v63 = vlaneseq
  %v64 = vshrl.u32 %v63, 7
  %v65 = vsub.s32 1, %v64
  %v66 = vrot.slane %v39, %v65
  %vm67 = vcmp.eq.s32.totalorder %v62, 1
  %vm68 = vcmp.eq.s32.totalorder %v66, 1
  %v69 = vsel %vm67, %v57, 0.0
  %v70 = vsel %vm68, %v58, 0.0
  %72 = vset.pattern.permute.xlu0 0
  %73 = vperm.xlu0 %72, %v20
  %v74 = vpop.permute.xlu0 %73
  %v76 = vmul.f32 %v74, %v50
  %v77 = vmul.f32 %v74, %v51
  %78 = vset.pattern.permute.xlu0 1
  %79 = vperm.xlu0 %78, %v20
  %v80 = vpop.permute.xlu0 %79
  %v82 = vmul.f32 %v80, %v25
  %v83 = vmul.f32 %v80, %v27
  %v84 = vadd.f32 %v76, %v82
  %v85 = vadd.f32 %v77, %v83
  %86 = vset.pattern.permute.xlu0 2
  %87 = vperm.xlu0 %86, %v20
  %v88 = vpop.permute.xlu0 %87
  %v90 = vmul.f32 %v88, %v69
  %v91 = vmul.f32 %v88, %v70
  %v92 = vadd.f32 %v84, %v90
  %v93 = vadd.f32 %v85, %v91
  %94 = vset.pattern.permute.xlu0 6
  %95 = vperm.xlu0 %94, %v20
  %v96 = vpop.permute.xlu0 %95
  %v98 = vmul.f32 %v96, %v50
  %v99 = vmul.f32 %v96, %v51
  %100 = vset.pattern.permute.xlu0 7
  %101 = vperm.xlu0 %100, %v20
  %v102 = vpop.permute.xlu0 %101
  %v104 = vmul.f32 %v102, %v25
  %v105 = vmul.f32 %v102, %v27
  %v106 = vadd.f32 %v98, %v104
  %v107 = vadd.f32 %v99, %v105
  %108 = vset.pattern.permute.xlu0 8
  %109 = vperm.xlu0 %108, %v20
  %v110 = vpop.permute.xlu0 %109
  %v112 = vmul.f32 %v110, %v69
  %v113 = vmul.f32 %v110, %v70
  %v114 = vadd.f32 %v106, %v112
  %v115 = vadd.f32 %v107, %v113
  %116 = vset.pattern.permute.xlu0 3
  %117 = vperm.xlu0 %116, %v20
  %v118 = vpop.permute.xlu0 %117
  %v120 = vmul.f32 %v118, %v50
  %v121 = vmul.f32 %v118, %v51
  %122 = vset.pattern.permute.xlu0 4
  %123 = vperm.xlu0 %122, %v20
  %v124 = vpop.permute.xlu0 %123
  %v126 = vmul.f32 %v124, %v25
  %v127 = vmul.f32 %v124, %v27
  %v128 = vadd.f32 %v120, %v126
  %v129 = vadd.f32 %v121, %v127
  %130 = vset.pattern.permute.xlu0 5
  %131 = vperm.xlu0 %130, %v20
  %v132 = vpop.permute.xlu0 %131
  %v134 = vmul.f32 %v132, %v69
  %v135 = vmul.f32 %v132, %v70
  %v136 = vadd.f32 %v128, %v134
  %v137 = vadd.f32 %v129, %v135
  %138 = vrot.lane.b32.xlu0 %v92, 16
  %v139 = vpop.permute.xlu0 %138
  %140 = vrot.lane.b32.xlu0 %v93, 16
  %v141 = vpop.permute.xlu0 %140
  %vm142 = vcmp.lt.s32.totalorder %v34, 16
  %v143 = vsel %vm142, %v139, %v141
  %v144 = vsel %vm142, %v141, %v139
  %v145 = vlaneseq
  %v146 = vshrl.u32 %v145, 7
  %v147 = vsub.s32 2, %v146
  %v148 = vrot.slane %v38, %v147
  %v149 = vlaneseq
  %v150 = vshrl.u32 %v149, 7
  %v151 = vsub.s32 2, %v150
  %v152 = vrot.slane %v39, %v151
  %vm153 = vcmp.eq.s32.totalorder %v148, 1
  %vm154 = vcmp.eq.s32.totalorder %v152, 1
  %v155 = vsel %vm153, %v144, 0.0
  %v156 = vsel %vm154, %v143, 0.0
  %v157 = vadd.f32 %v136, %v155
  %v158 = vadd.f32 %v137, %v156
  %159 = vrot.lane.b32.xlu0 %v114, 112
  %v160 = vpop.permute.xlu0 %159
  %161 = vrot.lane.b32.xlu0 %v115, 112
  %v162 = vpop.permute.xlu0 %161
  %vm163 = vcmp.lt.s32.totalorder %v34, 112
  %v164 = vsel %vm163, %v160, %v162
  %v165 = vsel %vm163, %v162, %v160
  %v166 = vlaneseq
  %v167 = vshrl.u32 %v166, 7
  %v168 = vsub.s32 3, %v167
  %v169 = vrot.slane %v38, %v168
  %v170 = vlaneseq
  %v171 = vshrl.u32 %v170, 7
  %v172 = vsub.s32 3, %v171
  %v173 = vrot.slane %v39, %v172
  %vm174 = vcmp.eq.s32.totalorder %v169, 1
  %vm175 = vcmp.eq.s32.totalorder %v173, 1
  %v176 = vsel %vm174, %v164, 0.0
  %v177 = vsel %vm175, %v165, 0.0
  %v178 = vadd.f32 %v157, %v176
  %v179 = vadd.f32 %v158, %v177
  %vm180 = vcmask 1043456
  %v181 = vsel %vm180, %v178, 0.0
  %v182 = vsel %vm180, %v179, 0.0
  %v183 = vadd.f32 %v181, %v182
  %184 = vadd.xlane.f32.xlu0 %v183
  %v185 = vpop.xlane.xlu0 %184
  %v186 = vadd.f32 %v185, 0.0
  %v187 = vmul.f32 %v178, %v178
  %v188 = vmul.f32 %v179, %v179
  %v189 = vsel %vm180, %v187, 0.0
  %v190 = vsel %vm180, %v188, 0.0
  %v191 = vadd.f32 %v189, %v190
  %192 = vadd.xlane.f32.xlu0 %v191
  %v193 = vpop.xlane.xlu0 %192
  %v194 = vadd.f32 %v193, 0.0
  %s195 = scalar_lea.vmem %s0, 8
  %v196 = vld [vmem:[%s195] sm:$0xff]
  %v198 = vcombine.high %v196, %v196
  %200 = vrot.lane.b32.xlu0 %v196, 1
  %v201 = vpop.permute.xlu0 %200
  %202 = vrot.lane.b32.xlu0 %v198, 1
  %v203 = vpop.permute.xlu0 %202
  %v204 = vsel %vm35, %v201, %v203
  %v205 = vsel %vm35, %v203, %v201
  %v206 = vsel %vm48, %v205, 0.0
  %v207 = vsel %vm49, %v204, 0.0
  %208 = vrot.lane.b32.xlu0 %v196, 127
  %v209 = vpop.permute.xlu0 %208
  %210 = vrot.lane.b32.xlu0 %v198, 127
  %v211 = vpop.permute.xlu0 %210
  %v212 = vsel %vm56, %v209, %v211
  %v213 = vsel %vm56, %v211, %v209
  %v214 = vsel %vm67, %v212, 0.0
  %v215 = vsel %vm68, %v213, 0.0
  %v216 = vmul.f32 %v74, %v206
  %v217 = vmul.f32 %v74, %v207
  %v218 = vmul.f32 %v80, %v196
  %v219 = vmul.f32 %v80, %v198
  %v220 = vadd.f32 %v216, %v218
  %v221 = vadd.f32 %v217, %v219
  %v222 = vmul.f32 %v88, %v214
  %v223 = vmul.f32 %v88, %v215
  %v224 = vadd.f32 %v220, %v222
  %v225 = vadd.f32 %v221, %v223
  %v226 = vmul.f32 %v96, %v206
  %v227 = vmul.f32 %v96, %v207
  %v228 = vmul.f32 %v102, %v196
  %v229 = vmul.f32 %v102, %v198
  %v230 = vadd.f32 %v226, %v228
  %v231 = vadd.f32 %v227, %v229
  %v232 = vmul.f32 %v110, %v214
  %v233 = vmul.f32 %v110, %v215
  %v234 = vadd.f32 %v230, %v232
  %v235 = vadd.f32 %v231, %v233
  %v236 = vmul.f32 %v118, %v206
  %v237 = vmul.f32 %v118, %v207
  %v238 = vmul.f32 %v124, %v196
  %v239 = vmul.f32 %v124, %v198
  %v240 = vadd.f32 %v236, %v238
  %v241 = vadd.f32 %v237, %v239
  %v242 = vmul.f32 %v132, %v214
  %v243 = vmul.f32 %v132, %v215
  %v244 = vadd.f32 %v240, %v242
  %v245 = vadd.f32 %v241, %v243
  %246 = vrot.lane.b32.xlu0 %v224, 16
  %v247 = vpop.permute.xlu0 %246
  %248 = vrot.lane.b32.xlu0 %v225, 16
  %v249 = vpop.permute.xlu0 %248
  %v250 = vsel %vm142, %v247, %v249
  %v251 = vsel %vm142, %v249, %v247
  %v252 = vsel %vm153, %v251, 0.0
  %v253 = vsel %vm154, %v250, 0.0
  %v254 = vadd.f32 %v244, %v252
  %v255 = vadd.f32 %v245, %v253
  %256 = vrot.lane.b32.xlu0 %v234, 112
  %v257 = vpop.permute.xlu0 %256
  %258 = vrot.lane.b32.xlu0 %v235, 112
  %v259 = vpop.permute.xlu0 %258
  %v260 = vsel %vm163, %v257, %v259
  %v261 = vsel %vm163, %v259, %v257
  %v262 = vsel %vm174, %v260, 0.0
  %v263 = vsel %vm175, %v261, 0.0
  %v264 = vadd.f32 %v254, %v262
  %v265 = vadd.f32 %v255, %v263
  %v266 = vsel %vm180, %v264, 0.0
  %v267 = vsel %vm180, %v265, 0.0
  %v268 = vadd.f32 %v266, %v267
  %269 = vadd.xlane.f32.xlu0 %v268
  %v270 = vpop.xlane.xlu0 %269
  %v271 = vadd.f32 %v186, %v270
  %v272 = vmul.f32 %v264, %v264
  %v273 = vmul.f32 %v265, %v265
  %v274 = vsel %vm180, %v272, 0.0
  %v275 = vsel %vm180, %v273, 0.0
  %v276 = vadd.f32 %v274, %v275
  %277 = vadd.xlane.f32.xlu0 %v276
  %v278 = vpop.xlane.xlu0 %277
  %v279 = vadd.f32 %v194, %v278
  %v280 = vmul.f32 %v271, 0.001953125
  %v281 = vmul.f32 %v279, 0.001953125
  %v282 = vmul.f32 %v280, %v280
  %v283 = vsub.f32 %v281, %v282
  %v284 = vmax.f32 %v283, 0.0
  %v285 = vld [vmem:[%s3] sm:$0xf]
  %v286 = vadd.f32 %v284, 1e-05
  %v287 = vrsqrt.pop %v286
  %v288 = vmul.f32 %v285, %v287
  %v289 = vld [vmem:[%s4] sm:$0xf]
  %v290 = vmul.f32 %v280, %v288
  %v291 = vsub.f32 %v289, %v290
  %293 = vset.pattern.permute.xlu0 0
  %294 = vperm.xlu0 %293, %v288
  %v295 = vpop.permute.xlu0 %294
  %v297 = vmul.f32 %v178, %v295
  %v298 = vmul.f32 %v179, %v295
  %300 = vset.pattern.permute.xlu0 0
  %301 = vperm.xlu0 %300, %v291
  %v302 = vpop.permute.xlu0 %301
  %v304 = vadd.f32 %v297, %v302
  %v305 = vadd.f32 %v298, %v302
  %v306 = vmax.f32 %v304, 0.0
  %v307 = vmax.f32 %v305, 0.0
  %v308 = vmin.f32 %v306, 6.0
  %v309 = vmin.f32 %v307, 6.0
  %v312 = vcombine.low %v308, %v309
  %314 = vst [vmem:[%s5] sm:$0xff] %v312
  %v315 = vmul.f32 %v264, %v295
  %v316 = vmul.f32 %v265, %v295
  %v317 = vadd.f32 %v315, %v302
  %v318 = vadd.f32 %v316, %v302
  %v319 = vmax.f32 %v317, 0.0
  %v320 = vmax.f32 %v318, 0.0
  %v321 = vmin.f32 %v319, 6.0
  %v322 = vmin.f32 %v320, 6.0
  %v325 = vcombine.low %v321, %v322
  %s327 = scalar_lea.vmem %s5, 8
  %328 = vst [vmem:[%s327] sm:$0xff] %v325
  // Predicated region
  $region22: #{spatialwise_conv.1} parent=0 // pred_check
    _
  $region23: #{spatialwise_conv.1} parent=0 // pred_check_branch
    %330 = sbr.rel (0) target = $region25
  $region24: #{spatialwise_conv.1} parent=0 // pred_region
    _
  $region25: #{spatialwise_conv.1} parent=0 // pred_fallthru
    _
  // Predicated region
  $region26: #{spatialwise_conv.1} parent=0 // pred_check
    _
  $region27: #{spatialwise_conv.1} parent=0 // pred_check_branch
    %332 = sbr.rel (0) target = $region29
  $region28: #{spatialwise_conv.1} parent=0 // pred_region
    _
  $region29: #{spatialwise_conv.1} parent=0 // pred_fallthru
    _

</llo_original>
